<compile_context>
chip_gen: v6e
topology: v6e:2x2x1
jax: 0.10.0
libtpu: 0.0.40
codegen_flags: <defaults>
</compile_context>

<pallas_src>
import numpy as np
import jax
import jax.numpy as jnp
from jax.experimental import pallas as pl
from jax.experimental.pallas import tpu as pltpu


def _posenc_kernel(x_ref, pos_ref, out_ref):
    # x_ref/out_ref: (bb, bs, Dp) tile; pos_ref: (bs, Dp) tile.
    # pos broadcasts over the leading batch-tile axis on the VPU.
    out_ref[...] = x_ref[...] + pos_ref[...]


def build_pos_table(dim_model, n_pos):
    """Sinusoidal table matching the PyTorch module construction (f32)."""
    i = np.arange(dim_model, dtype=np.float64)
    p = np.arange(n_pos, dtype=np.float64)[:, None]
    tab = p / np.power(10000.0, 2.0 * (i // 2) / dim_model)
    tab[:, 0::2] = np.sin(tab[:, 0::2])
    tab[:, 1::2] = np.cos(tab[:, 1::2])
    return jnp.asarray(tab, dtype=np.float32)            # (n_pos, D)


def _vmem_capacity_bytes():
    try:
        return int(pltpu.get_tpu_info().vmem_capacity_bytes)
    except Exception:
        return 64 * 1024 * 1024                           # v7x-safe fallback


def positional_encoding_forward(x, pos_table, *, block_b=None, block_s=None,
                                donate_x=False):
    """x: (B, S, D); pos_table: (n_pos, D) with n_pos >= S."""
    B, S, D = x.shape
    assert pos_table.shape[-2] >= S, "sequence length exceeds n_pos"
    itemsize = x.dtype.itemsize

    # Cast/slice the table once in the wrapper (outside the kernel).
    pos = pos_table[:S, :].astype(x.dtype)                # (S, D)

    # ---- lane-dense view: avoid masked stores when D is not a mult. of 128.
    if D % 128 != 0 and (S * D) % 128 == 0:
        Sp, Dp = 1, S * D
    else:
        Sp, Dp = S, D
    x3 = x.reshape(B, Sp, Dp)
    pos2 = pos.reshape(Sp, Dp)

    # ---- generation-aware VMEM budget for block data (x+out+pos buffers). --
    vmem_cap = _vmem_capacity_bytes()
    budget = min(vmem_cap // 2, 48 * 1024 * 1024)
    row_bytes = Dp * itemsize

    total_bytes = (2 * B * S * D + S * D) * itemsize
    tiny = total_bytes <= (1 << 20) and block_b is None and block_s is None

    if tiny:
        # Whole problem is a few KiB: single block, no pipelining overhead.
        bb, bs = B, Sp
    else:
        # Sequence tile: keep the pos block resident if small, else stream it.
        if block_s is not None:
            bs = max(1, min(block_s, Sp))
        elif Sp * row_bytes <= 4 * 1024 * 1024:
            bs = Sp
        else:
            bs = max(8, ((2 * 1024 * 1024) // row_bytes) // 8 * 8)
            bs = min(bs, Sp)
        tile_row = bs * row_bytes
        if block_b is not None:
            bb = max(1, min(block_b, B))
        else:
            # 2x(x) + 2x(out) double buffers + 2x pos block within budget.
            bb = max(1, (budget - 2 * tile_row) // (4 * tile_row))
            bb = min(bb, B)
            # v7x megacore: guarantee >=2 grid steps when the seq axis has 1.
            if bs == Sp and B >= 2:
                bb = min(bb, pl.cdiv(B, 2))

    nb = pl.cdiv(B, bb)
    ns = pl.cdiv(Sp, bs)

    footprint = (4 * bb + 2) * bs * row_bytes
    vmem_limit = int(min(vmem_cap, max(16 * 1024 * 1024,
                                       footprint + 8 * 1024 * 1024)))

    cost = pl.CostEstimate(
        flops=B * S * D,
        transcendentals=0,
        bytes_accessed=(2 * B * S * D + S * D) * itemsize)

    out3 = pl.pallas_call(
        _posenc_kernel,
        out_shape=jax.ShapeDtypeStruct((B, Sp, Dp), x.dtype),
        grid=(nb, ns),
        in_specs=[
            # x: tiled along batch and sequence, double-buffered by Pallas.
            pl.BlockSpec((bb, bs, Dp), lambda b, s: (b, s, 0)),
            # pos: indexed only by the sequence tile -> resident when ns == 1,
            # streamed per S-tile when the table is large.
            pl.BlockSpec((bs, Dp), lambda b, s: (s, 0)),
        ],
        out_specs=pl.BlockSpec((bb, bs, Dp), lambda b, s: (b, s, 0)),
        compiler_params=pltpu.CompilerParams(
            dimension_semantics=("parallel", "parallel"),
            vmem_limit_bytes=vmem_limit),
        cost_estimate=cost,
        # Optional: reuse x's HBM buffer for the output if the caller donates x.
        input_output_aliases=({0: 0} if donate_x else {}),
    )(x3, pos2)

    return out3.reshape(B, S, D)


def reference_forward(x, pos_table):
    """Pure-JAX reference mirroring the PyTorch module (add in x.dtype)."""
    S = x.shape[1]
    return x + pos_table[None, :S, :].astype(x.dtype)


if __name__ == "__main__":
    B, S, D, N_POS = 4, 8, 32, 16          # batch, seq, dim_model, n_pos
    key = jax.random.PRNGKey(0)

    x = jax.random.normal(key, (B, S, D), jnp.float32)
    pos_table = build_pos_table(D, N_POS)

    # Default path: tiny problem -> single whole-array lane-dense block.
    out = jax.block_until_ready(positional_encoding_forward(x, pos_table))
    # Explicit batch tiling -> grid=(2, 1), exercises the pipelined path.
    out_tiled = jax.block_until_ready(
        positional_encoding_forward(x, pos_table, block_b=2))

    ref = reference_forward(x, pos_table)
    assert out.shape == (B, S, D)
    assert jnp.allclose(out, ref, atol=1e-6, rtol=1e-6), "mismatch (default)"
    assert jnp.allclose(out_tiled, ref, atol=1e-6, rtol=1e-6), "mismatch (tiled)"

    print("KERNEL_OK")
</pallas_src>

<mosaic_0001>
module attributes {stable_mosaic.version = 11 : i64} {
  func.func @_posenc_kernel(%arg0: i32, %arg1: i32, %arg2: memref<4x1x256xf32, #tpu.memory_space<vmem>>, %arg3: memref<1x256xf32, #tpu.memory_space<vmem>>, %arg4: memref<4x1x256xf32, #tpu.memory_space<vmem>>) attributes {dimension_semantics = [#tpu.dimension_semantics<parallel>, #tpu.dimension_semantics<parallel>], iteration_bounds = array<i64: 1, 1>, scalar_prefetch = 0 : i64, scratch_operands = 0 : i64, tpu.core_type = #tpu.core_type<tc>, window_params = [{transform_indices = @transform_0, window_bounds = array<i64: 4, 1, 256>}, {transform_indices = @transform_1, window_bounds = array<i64: 1, 256>}, {transform_indices = @transform_2, window_bounds = array<i64: 4, 1, 256>}]} {
    %c0 = arith.constant 0 : index
    %c0_0 = arith.constant 0 : index
    %c0_1 = arith.constant 0 : index
    %0 = vector.load %arg2[%c0, %c0_0, %c0_1] : memref<4x1x256xf32, #tpu.memory_space<vmem>>, vector<4x1x256xf32>
    %c0_2 = arith.constant 0 : index
    %c0_3 = arith.constant 0 : index
    %1 = vector.load %arg3[%c0_2, %c0_3] : memref<1x256xf32, #tpu.memory_space<vmem>>, vector<1x256xf32>
    %2 = vector.shape_cast %1 : vector<1x256xf32> to vector<1x1x256xf32>
    %3 = vector.broadcast %2 : vector<1x1x256xf32> to vector<4x1x256xf32>
    %4 = arith.addf %0, %3 : vector<4x1x256xf32>
    %c0_4 = arith.constant 0 : index
    %c0_5 = arith.constant 0 : index
    %c0_6 = arith.constant 0 : index
    %5 = vector.load %arg4[%c0_4, %c0_5, %c0_6] : memref<4x1x256xf32, #tpu.memory_space<vmem>>, vector<4x1x256xf32>
    tpu.vector_store %arg4[%c0_4, %c0_5, %c0_6], %4 {strides = array<i32>} : memref<4x1x256xf32, #tpu.memory_space<vmem>>, vector<4x1x256xf32>,
    return
  }
  func.func @transform_0(%arg0: i32, %arg1: i32) -> (i32, i32, i32) {
    %c0_i32 = arith.constant 0 : i32
    %c0_i32_0 = arith.constant 0 : i32
    return %arg0, %arg1, %c0_i32 : i32, i32, i32
  }
  func.func @transform_1(%arg0: i32, %arg1: i32) -> (i32, i32) {
    %c0_i32 = arith.constant 0 : i32
    %c0_i32_0 = arith.constant 0 : i32
    return %arg1, %c0_i32 : i32, i32
  }
  func.func @transform_2(%arg0: i32, %arg1: i32) -> (i32, i32, i32) {
    %c0_i32 = arith.constant 0 : i32
    %c0_i32_0 = arith.constant 0 : i32
    return %arg0, %arg1, %c0_i32 : i32, i32, i32
  }
}

</mosaic_0001>

<llo_original>
// kernel: tpu_custom_call.1
$region0: #{tpu_custom_call.1}
  #allocation0 [shape = 'u32[]', space=smem, size = 0x4, offset = 0x4, fixed_abs, tag = 'smem constant byte address 0x4 - core index']
  #allocation1 [shape = 'u32[144,128]{1,0:T(1,128)}', space=vmem, size = 0x12000, scoped, tag = 'internal scratch']
  %s0 = inlined_call_operand.hbm [shape: f32[4,1,256], index: 0, kind: input, shape index: {}]
  %s1 = inlined_call_operand.hbm [shape: f32[1,256], index: 1, kind: input, shape index: {}]
  %s2 = inlined_call_operand.hbm [shape: f32[4,1,256], index: 2, kind: output, shape index: {}]
  %s3 = sld [smem:[#allocation0]]
  $region26: #{tpu_custom_call.1} parent=0
    _
  %s5 = ssub.s32 1, %s3
  %s6 = scalar_select 0, %s5, %s3
  $region1: #{tpu_custom_call.1} parent=0
    #allocation2 [shape = 'u8[4096]{0}', space=vmem, size = 0x1000, scoped, tag = 'input window, operand 0, single buffered']
    #allocation3 [shape = 's32[1]{0}', space=sflag, size = 0x4, scoped, tag = 'scoped memory for tpu_custom_call.1']
    #allocation4 [shape = 's32[1]{0}', space=sflag, size = 0x4, scoped, tag = 'scoped memory for tpu_custom_call.1']
    #allocation5 [shape = 'u8[1024]{0}', space=vmem, size = 0x400, scoped, tag = 'input window, operand 1, single buffered']
    #allocation6 [shape = 's32[1]{0}', space=sflag, size = 0x4, scoped, tag = 'scoped memory for tpu_custom_call.1']
    #allocation7 [shape = 'u8[4096]{0}', space=vmem, size = 0x1000, scoped, tag = 'output window, operand 0, single buffered']
    %7 = vsyncpa [#allocation3], 0
    %8 = vsyncpa [#allocation6], 0
    %9 = vsyncpa [#allocation4], 0
    // Predicated region
    $region2: #{tpu_custom_call.1} parent=1 // pred_check
      _
    $region3: #{tpu_custom_call.1} parent=1 // pred_check_branch
      %11 = sbr.rel (0) target = $region5
    $region4: #{tpu_custom_call.1} parent=1 // pred_region
      %s13 = ssub.s32 128, 128
      %14 = vsyncadd [#allocation3], %s13
      %s15 = sshll.u32 [#allocation2], 4
      %s16 = int_to_ptr.vmem [resolvable:$true] %s15
      %21 = dma.hbm_to_vmem [thread:$0]  %s0, 128, %s16, [#allocation3], 32, 32, 2
    $region5: #{tpu_custom_call.1} parent=1 // pred_fallthru
      _
    // Predicated region
    $region6: #{tpu_custom_call.1} parent=1 // pred_check
      _
    $region7: #{tpu_custom_call.1} parent=1 // pred_check_branch
      %23 = sbr.rel (0) target = $region9
    $region8: #{tpu_custom_call.1} parent=1 // pred_region
      %s25 = ssub.s32 32, 32
      %26 = vsyncadd [#allocation6], %s25
      %s28 = sshll.u32 [#allocation5], 4
      %s29 = int_to_ptr.vmem [resolvable:$true] %s28
      %31 = dma.hbm_to_vmem [thread:$0]  %s1, 32, %s29, [#allocation6]
    $region9: #{tpu_custom_call.1} parent=1 // pred_fallthru
      _
    // Predicated region
    $region10: #{tpu_custom_call.1} parent=1 // pred_check
      _
    $region11: #{tpu_custom_call.1} parent=1 // pred_check_branch
      %33 = sbr.rel (0) target = $region13
    $region12: #{tpu_custom_call.1} parent=1 // pred_region
      %34 = dma.done [#allocation3], 128
    $region13: #{tpu_custom_call.1} parent=1 // pred_fallthru
      _
    // Predicated region
    $region14: #{tpu_custom_call.1} parent=1 // pred_check
      _
    $region15: #{tpu_custom_call.1} parent=1 // pred_check_branch
      %36 = sbr.rel (0) target = $region17
    $region16: #{tpu_custom_call.1} parent=1 // pred_region
      %37 = dma.done [#allocation6], 32
    $region17: #{tpu_custom_call.1} parent=1 // pred_fallthru
      _
    %v38 = vld [vmem:[#allocation2] sm:$0x3]
    %v39 = vld [vmem:[#allocation2 + $0x2] sm:$0x3]
    %v40 = vld [vmem:[#allocation2 + $0x4] sm:$0x3]
    %v41 = vld [vmem:[#allocation2 + $0x6] sm:$0x3]
    %v42 = vld [vmem:[#allocation5] sm:$0x3]
    %v43 = vadd.f32 %v38, %v42
    %v44 = vadd.f32 %v39, %v42
    %v45 = vadd.f32 %v40, %v42
    %v46 = vadd.f32 %v41, %v42
    %v47 = vlaneseq
    %vm48 = vcmp.ge.s32.totalorder %v47, 0
    %vm49 = vcmp.lt.s32.totalorder %v47, 256
    %vm50 = vmand %vm48, %vm49
    %51 = vst.msk [vmem:[#allocation7] sm:$0x3] %vm50, %v43
    %52 = vst.msk [vmem:[#allocation7 + $0x2] sm:$0x3] %vm50, %v44
    %53 = vst.msk [vmem:[#allocation7 + $0x4] sm:$0x3] %vm50, %v45
    %54 = vst.msk [vmem:[#allocation7 + $0x6] sm:$0x3] %vm50, %v46
    // Predicated region
    $region18: #{tpu_custom_call.1} parent=1 // pred_check
      _
    $region19: #{tpu_custom_call.1} parent=1 // pred_check_branch
      %56 = sbr.rel (0) target = $region21
    $region20: #{tpu_custom_call.1} parent=1 // pred_region
      %s58 = ssub.s32 128, 128
      %59 = vsyncadd [#allocation4], %s58
      %s60 = sshll.u32 [#allocation7], 4
      %s61 = int_to_ptr.vmem [resolvable:$true] %s60
      %66 = dma.vmem_to_hbm [thread:$0]  %s61, 128, %s2, [#allocation4], 32, 32, 2
    $region21: #{tpu_custom_call.1} parent=1 // pred_fallthru
      _
    // Predicated region
    $region22: #{tpu_custom_call.1} parent=1 // pred_check
      _
    $region23: #{tpu_custom_call.1} parent=1 // pred_check_branch
      %68 = sbr.rel (0) target = $region25
    $region24: #{tpu_custom_call.1} parent=1 // pred_region
      %69 = dma.done [#allocation4], 128
    $region25: #{tpu_custom_call.1} parent=1 // pred_fallthru
      _
    %70 = vsyncpa [#allocation3], 1
    %71 = vsyncpa [#allocation6], 1
    %72 = vsyncpa [#allocation4], 1

</llo_original>
